<compile_context>
chip_gen: v7x
topology: tpu7x:2x2x1
jax: 0.10.0
libtpu: 0.0.40
codegen_flags: <defaults>
</compile_context>

<pallas_src>
import jax
import jax.numpy as jnp
from jax.experimental import pallas as pl
from jax.experimental.pallas import tpu as pltpu


def _add_bias_kernel(inp_ref, bias_ref, out_ref):
    # inp_ref:  (TM, F) tile in VMEM
    # bias_ref: (1, F)  tile in VMEM (same block every grid step -> resident)
    # Broadcast add over rows on the VPU.
    out_ref[...] = inp_ref[...] + bias_ref[...]


def _round_up(x: int, m: int) -> int:
    return ((x + m - 1) // m) * m


def _sublane_multiple(dtype) -> int:
    # f32 -> 8, bf16/f16 -> 16, int8/fp8 -> 32 (sub-32-bit packs along sublanes).
    return max(8, 32 // jnp.dtype(dtype).itemsize)


def _choose_tile_rows(n_rows: int, n_cols: int, dtype,
                      target_block_bytes: int = 4 << 20,
                      working_vmem_bytes: int = 32 << 20) -> int:
    """Pick a row tile: big enough to amortize per-step overhead, small enough
    that in+out double-buffering (4 live blocks) fits the VMEM budget."""
    itemsize = jnp.dtype(dtype).itemsize
    sub = _sublane_multiple(dtype)
    row_bytes = n_cols * itemsize
    tm = min(target_block_bytes // row_bytes,
             working_vmem_bytes // (4 * row_bytes))
    tm = max(int(tm), sub)
    tm = min(tm, n_rows)
    tm = _round_up(tm, sub)
    # Give the v7x megacore (2 TCs sharding the "parallel" grid axis) at least
    # 2 grid steps whenever N allows; near-zero cost on v5e/v6e (1 TC).
    if pl.cdiv(n_rows, tm) < 2 and n_rows > sub:
        tm = _round_up(pl.cdiv(n_rows, 2), sub)
    return tm


def add_bias(inp: jax.Array, bias: jax.Array, *, donate_input: bool = False) -> jax.Array:
    """out[n, f] = inp[n, f] + bias[f]  (forward of AddBias)."""
    assert inp.ndim == 2, "expected (N, F) input layout"
    N, F = inp.shape
    assert bias.shape == (F,), "bias must match feature (last) dim"

    dtype = inp.dtype
    bias = bias.astype(dtype)

    # Lane-dense repack: if F < 128 and divides 128, fold k = 128 // F rows
    # into one lane-dense row so stores are full unmasked 128-lane vst.
    x = inp
    b_row = bias
    if F % 128 != 0 and 128 % F == 0 and N % (128 // F) == 0:
        k = 128 // F
        x = inp.reshape(N // k, k * F)
        b_row = jnp.tile(bias, k)
    Nr, Fr = x.shape

    tm = _choose_tile_rows(Nr, Fr, dtype)
    grid = (pl.cdiv(Nr, tm),)

    out = pl.pallas_call(
        _add_bias_kernel,
        out_shape=jax.ShapeDtypeStruct((Nr, Fr), dtype),
        grid_spec=pl.GridSpec(
            grid=grid,
            in_specs=[
                pl.BlockSpec((tm, Fr), lambda i: (i, 0)),
                pl.BlockSpec((1, Fr), lambda i: (0, 0)),   # resident bias
            ],
            out_specs=pl.BlockSpec((tm, Fr), lambda i: (i, 0)),
        ),
        compiler_params=pltpu.CompilerParams(
            dimension_semantics=("parallel",),
            vmem_limit_bytes=48 * 1024 * 1024,
        ),
        input_output_aliases={0: 0} if donate_input else {},
    )(x, b_row.reshape(1, Fr))

    return out.reshape(N, F)


if __name__ == "__main__":
    key = jax.random.PRNGKey(0)
    k_inp, k_bias, k_inp2, k_bias2 = jax.random.split(key, 4)

    # Case 1: GAT-like shape, f32, F multiple of 128.
    N, F = 256, 128
    inp = jax.random.normal(k_inp, (N, F), dtype=jnp.float32)
    bias = jax.random.normal(k_bias, (F,), dtype=jnp.float32) * 0.1

    out = add_bias(inp, bias)
    out = jax.block_until_ready(out)
    ref = inp + bias[None, :]
    assert out.shape == (N, F)
    assert out.dtype == inp.dtype
    assert jnp.allclose(out, ref, atol=1e-6), "f32 mismatch vs reference"

    # Case 2: per-head feature dim F=64 (< 128) in bf16 — exercises the
    # lane-dense repack path and bf16 sublane-aligned tiling.
    N2, F2 = 64, 64
    inp2 = jax.random.normal(k_inp2, (N2, F2), dtype=jnp.float32).astype(jnp.bfloat16)
    bias2 = (jax.random.normal(k_bias2, (F2,), dtype=jnp.float32) * 0.1).astype(jnp.bfloat16)

    out2 = add_bias(inp2, bias2)
    out2 = jax.block_until_ready(out2)
    ref2 = inp2 + bias2[None, :]
    assert out2.shape == (N2, F2)
    assert out2.dtype == jnp.bfloat16
    assert jnp.allclose(out2.astype(jnp.float32), ref2.astype(jnp.float32),
                        atol=1e-2), "bf16 mismatch vs reference"

    print("KERNEL_OK")
</pallas_src>

<mosaic_0001>
module attributes {stable_mosaic.version = 11 : i64} {
  func.func @_add_bias_kernel(%arg0: i32, %arg1: memref<128x128xf32, #tpu.memory_space<vmem>>, %arg2: memref<1x128xf32, #tpu.memory_space<vmem>>, %arg3: memref<128x128xf32, #tpu.memory_space<vmem>>) attributes {dimension_semantics = [#tpu.dimension_semantics<parallel>], iteration_bounds = array<i64: 2>, scalar_prefetch = 0 : i64, scratch_operands = 0 : i64, tpu.core_type = #tpu.core_type<tc>, window_params = [{transform_indices = @transform_0, window_bounds = array<i64: 128, 128>}, {pipeline_mode = #tpu.pipeline_mode<synchronous>, transform_indices = @transform_1, window_bounds = array<i64: 1, 128>}, {transform_indices = @transform_2, window_bounds = array<i64: 128, 128>}]} {
    %c0 = arith.constant 0 : index
    %c0_0 = arith.constant 0 : index
    %0 = vector.load %arg1[%c0, %c0_0] : memref<128x128xf32, #tpu.memory_space<vmem>>, vector<128x128xf32>
    %c0_1 = arith.constant 0 : index
    %c0_2 = arith.constant 0 : index
    %1 = vector.load %arg2[%c0_1, %c0_2] : memref<1x128xf32, #tpu.memory_space<vmem>>, vector<1x128xf32>
    %2 = vector.broadcast %1 : vector<1x128xf32> to vector<128x128xf32>
    %3 = arith.addf %0, %2 : vector<128x128xf32>
    %c0_3 = arith.constant 0 : index
    %c0_4 = arith.constant 0 : index
    %4 = vector.load %arg3[%c0_3, %c0_4] : memref<128x128xf32, #tpu.memory_space<vmem>>, vector<128x128xf32>
    tpu.vector_store %arg3[%c0_3, %c0_4], %3 {strides = array<i32>} : memref<128x128xf32, #tpu.memory_space<vmem>>, vector<128x128xf32>,
    return
  }
  func.func @transform_0(%arg0: i32) -> (i32, i32) {
    %c0_i32 = arith.constant 0 : i32
    %c0_i32_0 = arith.constant 0 : i32
    return %arg0, %c0_i32 : i32, i32
  }
  func.func @transform_1(%arg0: i32) -> (i32, i32) {
    %c0_i32 = arith.constant 0 : i32
    %c0_i32_0 = arith.constant 0 : i32
    %c0_i32_1 = arith.constant 0 : i32
    return %c0_i32, %c0_i32_0 : i32, i32
  }
  func.func @transform_2(%arg0: i32) -> (i32, i32) {
    %c0_i32 = arith.constant 0 : i32
    %c0_i32_0 = arith.constant 0 : i32
    return %arg0, %c0_i32 : i32, i32
  }
}

</mosaic_0001>

<llo_original>
// kernel: tpu_custom_call.1
$region0: #{tpu_custom_call.1}
  #allocation0 [shape = 'u32[]', space=smem, size = 0x4, offset = 0x4, fixed_abs, tag = 'smem constant byte address 0x4 - core index']
  #allocation1 [shape = 'u32[144,128]{1,0:T(1,128)}', space=vmem, size = 0x12000, scoped, tag = 'internal scratch']
  %s0 = inlined_call_operand.hbm [shape: f32[256,128], index: 0, kind: input, shape index: {}]
  %s1 = inlined_call_operand.vmem [shape: f32[1,128], index: 1, kind: input, shape index: {}]
  %s2 = inlined_call_operand.hbm [shape: f32[256,128], index: 2, kind: output, shape index: {}]
  %s3 = sld [smem:[#allocation0]]
  $region45: #{tpu_custom_call.1} parent=0
    _
  %s5 = ssub.s32 1, %s3
  %s6 = scalar_select 0, %s5, %s3
  $region1: #{tpu_custom_call.1} parent=0
    #allocation2 [shape = 'u8[131072]{0}', space=vmem, size = 0x20000, scoped, tag = 'input window, operand 0']
    #allocation3 [shape = 's32[2]{0}', space=sflag, size = 0x8, scoped, tag = 'scoped memory for tpu_custom_call.1']
    #allocation4 [shape = 's32[2]{0}', space=sflag, size = 0x8, scoped, tag = 'scoped memory for tpu_custom_call.1']
    #allocation5 [shape = 'u8[131072]{0}', space=vmem, size = 0x20000, scoped, tag = 'output window, operand 0']
    %7 = vsyncpa [#allocation3], 0
    %s8 = scalar_lea.sflag [#allocation3], 1
    %9 = vsyncpa %s8, 0
    %10 = vsyncpa [#allocation4], 0
    %s11 = scalar_lea.sflag [#allocation4], 1
    %12 = vsyncpa %s11, 0
    loop: start=0, step=1, limit=4
    $region2: #{tpu_custom_call.1} parent=1 // loop_pre_header
      _
    $region3: #{tpu_custom_call.1} parent=1 // loop_header
      %s14 = sphi 0, %s18
      %p15 = scmp.ge.s32.totalorder %s14, 4
      %s24 = sphi 0, %s26
      %s27 = sphi 0, %s24
      %s28 = sphi 0, %s27
      %s44 = sphi 0, %s28
      %s48 = sphi 0, %s48
      %s50 = sphi 0, %s48
      %s51 = sphi 0, %s50
      %s65 = sphi 0, %s51
      %s71 = sphi 0, %s73
      %s74 = sphi 0, %s71
      %s75 = sphi 0, %s74
      %s91 = sphi 0, %s75
    $region4: #{tpu_custom_call.1} parent=1 // loop_header_branch
      %17 = sbr.rel (%p15) target = $region8
    $region5: #{tpu_custom_call.1} parent=1 // loop_body
      %s19 = ssub.s32 %s14, 1
      %s20 = ssub.s32 %s14, 2
      %s21 = sadd.s32 %s14, 1
      %s22 = ssub.s32 %s14, %s21
      %p23 = scmp.eq.s32.totalorder %s22, 0
      %s25 = sadd.s32 %s24, 1
      %s26 = scalar_select %p23, %s24, %s25
      %p29 = pneg %p23
      %p30 = scmp.eq.s32.totalorder %s14, 1
      %p31 = por %p29, %p30
      %p32 = scmp.ne.s32.totalorder %s24, %s27
      %p33 = scmp.eq.s32.totalorder %s14, 0
      %p34 = por %p32, %p33
      %p35 = scmp.ne.s32.totalorder %s24, %s27
      %p36 = scmp.eq.s32.totalorder %s19, 1
      %p37 = por %p35, %p36
      %p38 = scmp.ne.s32.totalorder %s27, %s28
      %p39 = scmp.eq.s32.totalorder %s19, 0
      %p40 = por %p38, %p39
      %p41 = scmp.ne.s32.totalorder %s27, %s28
      %p42 = scmp.eq.s32.totalorder %s20, 1
      %p43 = por %p41, %p42
      %p45 = scmp.ne.s32.totalorder %s28, %s44
      %p46 = scmp.eq.s32.totalorder %s20, 0
      %p47 = por %p45, %p46
      %s49 = sadd.s32 %s48, 1
      %p52 = scmp.eq.s32.totalorder %s14, 1
      %p53 = scmp.ne.s32.totalorder %s48, %s50
      %p54 = scmp.eq.s32.totalorder %s14, 0
      %p55 = por %p53, %p54
      %p56 = scmp.ne.s32.totalorder %s48, %s50
      %p57 = scmp.eq.s32.totalorder %s19, 1
      %p58 = por %p56, %p57
      %p59 = scmp.ne.s32.totalorder %s50, %s51
      %p60 = scmp.eq.s32.totalorder %s19, 0
      %p61 = por %p59, %p60
      %p62 = scmp.ne.s32.totalorder %s50, %s51
      %p63 = scmp.eq.s32.totalorder %s20, 1
      %p64 = por %p62, %p63
      %p66 = scmp.ne.s32.totalorder %s51, %s65
      %p67 = scmp.eq.s32.totalorder %s20, 0
      %p68 = por %p66, %p67
      %s69 = ssub.s32 %s14, %s21
      %p70 = scmp.eq.s32.totalorder %s69, 0
      %s72 = sadd.s32 %s71, 1
      %s73 = scalar_select %p70, %s71, %s72
      %p76 = pneg %p70
      %p77 = scmp.eq.s32.totalorder %s14, 1
      %p78 = por %p76, %p77
      %p79 = scmp.ne.s32.totalorder %s71, %s74
      %p80 = scmp.eq.s32.totalorder %s14, 0
      %p81 = por %p79, %p80
      %p82 = scmp.ne.s32.totalorder %s71, %s74
      %p83 = scmp.eq.s32.totalorder %s19, 1
      %p84 = por %p82, %p83
      %p85 = scmp.ne.s32.totalorder %s74, %s75
      %p86 = scmp.eq.s32.totalorder %s19, 0
      %p87 = por %p85, %p86
      %p88 = scmp.ne.s32.totalorder %s74, %s75
      %p89 = scmp.eq.s32.totalorder %s20, 1
      %p90 = por %p88, %p89
      %p92 = scmp.ne.s32.totalorder %s75, %s91
      %p93 = scmp.eq.s32.totalorder %s20, 0
      %p94 = por %p92, %p93
      %p95 = scmp.le.s32.totalorder 1, %s14
      %p96 = scmp.lt.s32.totalorder %s14, 3
      %p97 = pnand %p95, %p96
      %p98 = pneg %p97
      // Predicated region
      $region9: #{tpu_custom_call.1} parent=5 // pred_check
        _
      $region10: #{tpu_custom_call.1} parent=5 // pred_check_branch
        %100 = sbr.rel (%p97) target = $region12
      $region11: #{tpu_custom_call.1} parent=5 // pred_region
        %s101 = ssub.s32 %s14, 1
        // Predicated region
        $region13: #{tpu_custom_call.1} parent=11 // pred_check
          %p102 = pneg %p61
        $region14: #{tpu_custom_call.1} parent=11 // pred_check_branch
          %104 = sbr.rel (%p102) target = $region16
        $region15: #{tpu_custom_call.1} parent=11 // pred_region
          _
        $region16: #{tpu_custom_call.1} parent=11 // pred_fallthru
          _
      $region12: #{tpu_custom_call.1} parent=5 // pred_fallthru
        _
      %p105 = scmp.lt.s32.totalorder %s14, 2
      // Predicated region
      $region17: #{tpu_custom_call.1} parent=5 // pred_check
        %p106 = pneg %p105
      $region18: #{tpu_custom_call.1} parent=5 // pred_check_branch
        %108 = sbr.rel (%p106) target = $region20
      $region19: #{tpu_custom_call.1} parent=5 // pred_region
        // Predicated region
        $region21: #{tpu_custom_call.1} parent=19 // pred_check
          %p109 = pneg %p34
        $region22: #{tpu_custom_call.1} parent=19 // pred_check_branch
          %111 = sbr.rel (%p109) target = $region24
        $region23: #{tpu_custom_call.1} parent=19 // pred_region
          %s112 = sand.u32 %s24, 1
          %s113 = scalar_lea.sflag [#allocation3], %s112
          %s114 = sand.u32 %s24, 1
          %s115 = smul.addr %s114, 128
          %s116 = scalar_lea.vmem [#allocation2], %s115
          %s117 = smul.u32 16, %s14
          %s119 = ssub.s32 2048, 2048
          %120 = vsyncadd %s113, %s119
          %s121 = smul.addr %s117, 128
          %s122 = scalar_lea.hbm %s0, %s121
          %s123 = sshll.u32 %s116, 4
          %s124 = int_to_ptr.vmem [resolvable:$true] %s123
          %129 = dma.hbm_to_vmem [thread:$0]  %s122, 2048, %s124, %s113, 128, 128, 8
        $region24: #{tpu_custom_call.1} parent=19 // pred_fallthru
          _
      $region20: #{tpu_custom_call.1} parent=5 // pred_fallthru
        _
      %p130 = scmp.le.s32.totalorder 1, %s14
      %p131 = scmp.lt.s32.totalorder %s14, 3
      %p132 = pnand %p130, %p131
      %p133 = pneg %p132
      // Predicated region
      $region25: #{tpu_custom_call.1} parent=5 // pred_check
        _
      $region26: #{tpu_custom_call.1} parent=5 // pred_check_branch
        %135 = sbr.rel (%p132) target = $region28
      $region27: #{tpu_custom_call.1} parent=5 // pred_region
        %s136 = ssub.s32 %s14, 1
        %s137 = sand.u32 %s27, 1
        %s138 = scalar_lea.sflag [#allocation3], %s137
        %s139 = sand.u32 %s27, 1
        %s140 = smul.addr %s139, 128
        %s141 = scalar_lea.vmem [#allocation2], %s140
        // Predicated region
        $region29: #{tpu_custom_call.1} parent=27 // pred_check
          %p142 = pneg %p40
        $region30: #{tpu_custom_call.1} parent=27 // pred_check_branch
          %144 = sbr.rel (%p142) target = $region32
        $region31: #{tpu_custom_call.1} parent=27 // pred_region
          %145 = dma.done %s138, 2048
        $region32: #{tpu_custom_call.1} parent=27 // pred_fallthru
          _
        %s146 = sand.u32 %s27, 1
        %s147 = scalar_lea.sflag [#allocation3], %s146
        %s148 = sand.u32 %s27, 1
        %s149 = smul.addr %s148, 128
        %s150 = scalar_lea.vmem [#allocation2], %s149
        %p151 = pneg %p40
        %p152 = pneg %p37
        %p153 = pneg %p61
        %p154 = pneg %p58
        %p155 = pneg %p87
        %p156 = pneg %p84
        %s157 = sand.u32 %s74, 1
        %s158 = scalar_lea.sflag [#allocation4], %s157
        %s159 = sand.u32 %s74, 1
        %s160 = smul.addr %s159, 128
        %s161 = scalar_lea.vmem [#allocation5], %s160
        %s162 = smul.u32 16, %s19
        %s163 = smul.u32 16, %s19
        %v164 = vld [vmem:[%s141] sm:$0xff]
        %v165 = vld [vmem:[%s141 + $0x8] sm:$0xff]
        %v166 = vld [vmem:[%s141 + $0x10] sm:$0xff]
        %v167 = vld [vmem:[%s141 + $0x18] sm:$0xff]
        %v168 = vld [vmem:[%s141 + $0x20] sm:$0xff]
        %v169 = vld [vmem:[%s141 + $0x28] sm:$0xff]
        %v170 = vld [vmem:[%s141 + $0x30] sm:$0xff]
        %v171 = vld [vmem:[%s141 + $0x38] sm:$0xff]
        %v172 = vld [vmem:[%s141 + $0x40] sm:$0xff]
        %v173 = vld [vmem:[%s141 + $0x48] sm:$0xff]
        %v174 = vld [vmem:[%s141 + $0x50] sm:$0xff]
        %v175 = vld [vmem:[%s141 + $0x58] sm:$0xff]
        %v176 = vld [vmem:[%s141 + $0x60] sm:$0xff]
        %v177 = vld [vmem:[%s141 + $0x68] sm:$0xff]
        %v178 = vld [vmem:[%s141 + $0x70] sm:$0xff]
        %v179 = vld [vmem:[%s141 + $0x78] sm:$0xff]
        %v180 = vld [vmem:[%s1] sm:$0x1]
        %v182 = vlaneseq
        %v183 = vshrl.u32 %v182, 7
        %v184 = vsub.s32 0, %v183
        %v185 = vrot.slane %v180, %v184
        %v187 = vadd.f32 %v164, %v185
        %v188 = vadd.f32 %v165, %v185
        %v189 = vadd.f32 %v166, %v185
        %v190 = vadd.f32 %v167, %v185
        %v191 = vadd.f32 %v168, %v185
        %v192 = vadd.f32 %v169, %v185
        %v193 = vadd.f32 %v170, %v185
        %v194 = vadd.f32 %v171, %v185
        %v195 = vadd.f32 %v172, %v185
        %v196 = vadd.f32 %v173, %v185
        %v197 = vadd.f32 %v174, %v185
        %v198 = vadd.f32 %v175, %v185
        %v199 = vadd.f32 %v176, %v185
        %v200 = vadd.f32 %v177, %v185
        %v201 = vadd.f32 %v178, %v185
        %v202 = vadd.f32 %v179, %v185
        %203 = vst [vmem:[%s161] sm:$0xff] %v187
        %204 = vst [vmem:[%s161 + $0x8] sm:$0xff] %v188
        %205 = vst [vmem:[%s161 + $0x10] sm:$0xff] %v189
        %206 = vst [vmem:[%s161 + $0x18] sm:$0xff] %v190
        %207 = vst [vmem:[%s161 + $0x20] sm:$0xff] %v191
        %208 = vst [vmem:[%s161 + $0x28] sm:$0xff] %v192
        %209 = vst [vmem:[%s161 + $0x30] sm:$0xff] %v193
        %210 = vst [vmem:[%s161 + $0x38] sm:$0xff] %v194
        %211 = vst [vmem:[%s161 + $0x40] sm:$0xff] %v195
        %212 = vst [vmem:[%s161 + $0x48] sm:$0xff] %v196
        %213 = vst [vmem:[%s161 + $0x50] sm:$0xff] %v197
        %214 = vst [vmem:[%s161 + $0x58] sm:$0xff] %v198
        %215 = vst [vmem:[%s161 + $0x60] sm:$0xff] %v199
        %216 = vst [vmem:[%s161 + $0x68] sm:$0xff] %v200
        %217 = vst [vmem:[%s161 + $0x70] sm:$0xff] %v201
        %218 = vst [vmem:[%s161 + $0x78] sm:$0xff] %v202
        %s219 = sand.u32 %s74, 1
        %s220 = scalar_lea.sflag [#allocation4], %s219
        %s221 = sand.u32 %s74, 1
        %s222 = smul.addr %s221, 128
        %s223 = scalar_lea.vmem [#allocation5], %s222
        // Predicated region
        $region33: #{tpu_custom_call.1} parent=27 // pred_check
          %p224 = pneg %p84
        $region34: #{tpu_custom_call.1} parent=27 // pred_check_branch
          %226 = sbr.rel (%p224) target = $region36
        $region35: #{tpu_custom_call.1} parent=27 // pred_region
          %s227 = smul.u32 16, %s19
          %s229 = ssub.s32 2048, 2048
          %230 = vsyncadd %s220, %s229
          %s231 = smul.addr %s227, 128
          %s232 = scalar_lea.hbm %s2, %s231
          %s233 = sshll.u32 %s223, 4
          %s234 = int_to_ptr.vmem [resolvable:$true] %s233
          %239 = dma.vmem_to_hbm [thread:$0]  %s234, 2048, %s232, %s220, 128, 128, 8
        $region36: #{tpu_custom_call.1} parent=27 // pred_fallthru
          _
      $region28: #{tpu_custom_call.1} parent=5 // pred_fallthru
        _
      %p240 = scmp.le.s32.totalorder 2, %s14
      // Predicated region
      $region37: #{tpu_custom_call.1} parent=5 // pred_check
        %p241 = pneg %p240
      $region38: #{tpu_custom_call.1} parent=5 // pred_check_branch
        %243 = sbr.rel (%p241) target = $region40
      $region39: #{tpu_custom_call.1} parent=5 // pred_region
        %s244 = ssub.s32 %s14, 2
        // Predicated region
        $region41: #{tpu_custom_call.1} parent=39 // pred_check
          %p245 = pneg %p90
        $region42: #{tpu_custom_call.1} parent=39 // pred_check_branch
          %247 = sbr.rel (%p245) target = $region44
        $region43: #{tpu_custom_call.1} parent=39 // pred_region
          %s248 = sand.u32 %s75, 1
          %s249 = scalar_lea.sflag [#allocation4], %s248
          %s250 = sand.u32 %s75, 1
          %s251 = smul.addr %s250, 128
          %s252 = scalar_lea.vmem [#allocation5], %s251
          %253 = dma.done %s249, 2048
        $region44: #{tpu_custom_call.1} parent=39 // pred_fallthru
          _
      $region40: #{tpu_custom_call.1} parent=5 // pred_fallthru
        _
    $region6: #{tpu_custom_call.1} parent=1 // loop_footer
      %s18 = sadd.s32 1, %s14
    $region7: #{tpu_custom_call.1} parent=1 // loop_footer_branch
      %13 = sbr.rel target = $region3
    $region8: #{tpu_custom_call.1} parent=1 // loop_exit
      _
    %254 = vsyncpa [#allocation3], 1
    %s255 = scalar_lea.sflag [#allocation3], 1
    %256 = vsyncpa %s255, 1
    %257 = vsyncpa [#allocation4], 1
    %s258 = scalar_lea.sflag [#allocation4], 1
    %259 = vsyncpa %s258, 1

</llo_original>
